<compile_context>
chip_gen: v7x
topology: tpu7x:2x2x1
jax: 0.10.0
libtpu: 0.0.40
codegen_flags: <defaults>
</compile_context>

<pallas_src>
import functools
import math

import jax
import jax.numpy as jnp
from jax.experimental import pallas as pl
from jax.experimental.pallas import tpu as pltpu


# Scoped VMEM we request (safe on v5e/v6e/v7x: well under 64 MiB physical on
# v7x) and the budget for one grid step's double-buffered tiles:
#   2 x (sum of input tiles) + 2 x (output tile) ~= 4 x tile_rows x total_cols x itemsize
_VMEM_LIMIT_BYTES = 32 * 1024 * 1024
_TILE_BUDGET_BYTES = 24 * 1024 * 1024


def _concat_kernel(col_sizes, *refs):
    """refs = (*input_refs, out_ref); each is a (tile_rows, cols) VMEM tile.

    Copies every lane-dense input slab into its static column slice of the
    output slab.  All offsets are compile-time constants.
    """
    out_ref = refs[-1]
    in_refs = refs[:-1]
    offset = 0
    for r, size in zip(in_refs, col_sizes):
        out_ref[:, offset:offset + size] = r[...]
        offset += size


def _choose_row_tile(rows, total_cols, itemsize):
    """Largest row tile whose double-buffered footprint fits the VMEM budget."""
    bytes_per_row = max(1, 4 * total_cols * itemsize)
    max_rows = max(1, _TILE_BUDGET_BYTES // bytes_per_row)
    if max_rows >= rows or rows <= 8:
        return rows                              # whole row axis in one block
    return max(8, (max_rows // 8) * 8)           # sublane-aligned tile


def concat(xs, dim=1):
    """Pallas equivalent of torch.cat(xs, dim) for same-rank inputs."""
    xs = list(xs)
    if not xs:
        raise ValueError("concat: need at least one input")

    ndim = xs[0].ndim
    if dim < 0:
        dim += ndim
    if not 0 <= dim < ndim:
        raise ValueError(f"concat: invalid dim {dim} for rank-{ndim} inputs")

    # Validate shapes (all non-concat dims must match, like torch.cat).
    ref_shape = xs[0].shape
    for x in xs:
        if x.ndim != ndim:
            raise ValueError("concat: all inputs must have the same rank")
        for ax in range(ndim):
            if ax != dim and x.shape[ax] != ref_shape[ax]:
                raise ValueError(
                    f"concat: mismatched shape {x.shape} vs {ref_shape} "
                    f"outside concat dim {dim}")

    # Match torch.cat's type promotion: cast everything to the result dtype.
    dtype = jnp.result_type(*xs)
    xs = [x.astype(dtype) for x in xs]

    out_shape_nd = list(ref_shape)
    out_shape_nd[dim] = sum(x.shape[dim] for x in xs)
    out_shape_nd = tuple(out_shape_nd)

    if len(xs) == 1:
        return xs[0].reshape(out_shape_nd)

    # Lane-dense 2D view: rows = leading (non-concat) dims, cols = concat dim
    # fused with all trailing dims.  Row-major layout makes this equivalent to
    # the N-D concat, and puts the concat axis on the 128-lane axis.
    rows = math.prod(ref_shape[:dim])            # == 1 when dim == 0
    cols = [math.prod(x.shape[dim:]) for x in xs]
    total_cols = sum(cols)
    itemsize = jnp.dtype(dtype).itemsize

    xs2d = [x.reshape(rows, c) for x, c in zip(xs, cols)]

    tile_r = _choose_row_tile(rows, total_cols, itemsize)
    grid = (pl.cdiv(rows, tile_r),)

    vmem_limit = max(_VMEM_LIMIT_BYTES,
                     4 * tile_r * total_cols * itemsize + (2 << 20))

    kernel = functools.partial(_concat_kernel, tuple(cols))

    in_specs = [pl.BlockSpec((tile_r, c), lambda r: (r, 0)) for c in cols]
    out_spec = pl.BlockSpec((tile_r, total_cols), lambda r: (r, 0))

    out2d = pl.pallas_call(
        kernel,
        out_shape=jax.ShapeDtypeStruct((rows, total_cols), dtype),
        grid=grid,
        in_specs=in_specs,
        out_specs=out_spec,
        compiler_params=pltpu.CompilerParams(
            dimension_semantics=("parallel",),
            vmem_limit_bytes=vmem_limit,
        ),
    )(*xs2d)

    return out2d.reshape(out_shape_nd)


if __name__ == "__main__":
    key = jax.random.PRNGKey(0)
    k1, k2, k3 = jax.random.split(key, 3)

    # Small NCHW inputs with different channel counts, like a YOLO-style route.
    x1 = jax.random.normal(k1, (2, 4, 16, 16), dtype=jnp.float32)
    x2 = jax.random.normal(k2, (2, 6, 16, 16), dtype=jnp.float32)
    x3 = jax.random.normal(k3, (2, 2, 16, 16), dtype=jnp.float32)

    # Channel concat (the module's default, dimension=1).
    out = concat([x1, x2, x3], dim=1)
    out = jax.block_until_ready(out)
    ref = jnp.concatenate([x1, x2, x3], axis=1)
    assert out.shape == (2, 12, 16, 16), out.shape
    assert jnp.array_equal(out, ref), "Pallas concat mismatch vs jnp.concatenate (dim=1)"

    # Quick generality check on a different axis.
    out_h = jax.block_until_ready(concat([x1, x1], dim=2))
    ref_h = jnp.concatenate([x1, x1], axis=2)
    assert jnp.array_equal(out_h, ref_h), "Pallas concat mismatch vs jnp.concatenate (dim=2)"

    print("KERNEL_OK")
</pallas_src>

<mosaic_0001>
module attributes {stable_mosaic.version = 11 : i64} {
  func.func @_concat_kernel(%arg0: i32, %arg1: memref<2x1024xf32, #tpu.memory_space<vmem>>, %arg2: memref<2x1536xf32, #tpu.memory_space<vmem>>, %arg3: memref<2x512xf32, #tpu.memory_space<vmem>>, %arg4: memref<2x3072xf32, #tpu.memory_space<vmem>>) attributes {dimension_semantics = [#tpu.dimension_semantics<parallel>], iteration_bounds = array<i64: 1>, scalar_prefetch = 0 : i64, scratch_operands = 0 : i64, tpu.core_type = #tpu.core_type<tc>, window_params = [{transform_indices = @transform_0, window_bounds = array<i64: 2, 1024>}, {transform_indices = @transform_1, window_bounds = array<i64: 2, 1536>}, {transform_indices = @transform_2, window_bounds = array<i64: 2, 512>}, {transform_indices = @transform_3, window_bounds = array<i64: 2, 3072>}]} {
    %c0 = arith.constant 0 : index
    %c0_0 = arith.constant 0 : index
    %0 = vector.load %arg1[%c0, %c0_0] : memref<2x1024xf32, #tpu.memory_space<vmem>>, vector<2x1024xf32>
    %c0_1 = arith.constant 0 : index
    %c0_2 = arith.constant 0 : index
    %1 = vector.load %arg4[%c0_1, %c0_2] : memref<2x3072xf32, #tpu.memory_space<vmem>>, vector<2x1024xf32>
    tpu.vector_store %arg4[%c0_1, %c0_2], %0 {strides = array<i32>} : memref<2x3072xf32, #tpu.memory_space<vmem>>, vector<2x1024xf32>,
    %c0_3 = arith.constant 0 : index
    %c0_4 = arith.constant 0 : index
    %2 = vector.load %arg2[%c0_3, %c0_4] : memref<2x1536xf32, #tpu.memory_space<vmem>>, vector<2x1536xf32>
    %c0_5 = arith.constant 0 : index
    %c1024 = arith.constant 1024 : index
    %3 = vector.load %arg4[%c0_5, %c1024] : memref<2x3072xf32, #tpu.memory_space<vmem>>, vector<2x1536xf32>
    tpu.vector_store %arg4[%c0_5, %c1024], %2 {strides = array<i32>} : memref<2x3072xf32, #tpu.memory_space<vmem>>, vector<2x1536xf32>,
    %c0_6 = arith.constant 0 : index
    %c0_7 = arith.constant 0 : index
    %4 = vector.load %arg3[%c0_6, %c0_7] : memref<2x512xf32, #tpu.memory_space<vmem>>, vector<2x512xf32>
    %c0_8 = arith.constant 0 : index
    %c2560 = arith.constant 2560 : index
    %5 = vector.load %arg4[%c0_8, %c2560] : memref<2x3072xf32, #tpu.memory_space<vmem>>, vector<2x512xf32>
    tpu.vector_store %arg4[%c0_8, %c2560], %4 {strides = array<i32>} : memref<2x3072xf32, #tpu.memory_space<vmem>>, vector<2x512xf32>,
    return
  }
  func.func @transform_0(%arg0: i32) -> (i32, i32) {
    %c0_i32 = arith.constant 0 : i32
    %c0_i32_0 = arith.constant 0 : i32
    return %arg0, %c0_i32 : i32, i32
  }
  func.func @transform_1(%arg0: i32) -> (i32, i32) {
    %c0_i32 = arith.constant 0 : i32
    %c0_i32_0 = arith.constant 0 : i32
    return %arg0, %c0_i32 : i32, i32
  }
  func.func @transform_2(%arg0: i32) -> (i32, i32) {
    %c0_i32 = arith.constant 0 : i32
    %c0_i32_0 = arith.constant 0 : i32
    return %arg0, %c0_i32 : i32, i32
  }
  func.func @transform_3(%arg0: i32) -> (i32, i32) {
    %c0_i32 = arith.constant 0 : i32
    %c0_i32_0 = arith.constant 0 : i32
    return %arg0, %c0_i32 : i32, i32
  }
}

</mosaic_0001>

<llo_original>
// kernel: tpu_custom_call.1
$region0: #{tpu_custom_call.1}
  #allocation0 [shape = 'u32[]', space=smem, size = 0x4, offset = 0x4, fixed_abs, tag = 'smem constant byte address 0x4 - core index']
  #allocation1 [shape = 'u32[144,128]{1,0:T(1,128)}', space=vmem, size = 0x12000, scoped, tag = 'internal scratch']
  %s0 = inlined_call_operand.hbm [shape: f32[2,1024], index: 0, kind: input, shape index: {}]
  %s1 = inlined_call_operand.hbm [shape: f32[2,1536], index: 1, kind: input, shape index: {}]
  %s2 = inlined_call_operand.hbm [shape: f32[2,512], index: 2, kind: input, shape index: {}]
  %s3 = inlined_call_operand.hbm [shape: f32[2,3072], index: 3, kind: output, shape index: {}]
  %s4 = sld [smem:[#allocation0]]
  $region34: #{tpu_custom_call.1} parent=0
    _
  %s6 = ssub.s32 1, %s4
  %s7 = scalar_select 0, %s6, %s4
  $region1: #{tpu_custom_call.1} parent=0
    #allocation2 [shape = 'u8[8192]{0}', space=vmem, size = 0x2000, scoped, tag = 'input window, operand 0, single buffered']
    #allocation3 [shape = 's32[1]{0}', space=sflag, size = 0x4, scoped, tag = 'scoped memory for tpu_custom_call.1']
    #allocation4 [shape = 's32[1]{0}', space=sflag, size = 0x4, scoped, tag = 'scoped memory for tpu_custom_call.1']
    #allocation5 [shape = 'u8[12288]{0}', space=vmem, size = 0x3000, scoped, tag = 'input window, operand 1, single buffered']
    #allocation6 [shape = 's32[1]{0}', space=sflag, size = 0x4, scoped, tag = 'scoped memory for tpu_custom_call.1']
    #allocation7 [shape = 'u8[4096]{0}', space=vmem, size = 0x1000, scoped, tag = 'input window, operand 2, single buffered']
    #allocation8 [shape = 'u8[24576]{0}', space=vmem, size = 0x6000, scoped, tag = 'output window, operand 0, single buffered']
    %8 = vsyncpa [#allocation3], 0
    %9 = vsyncpa [#allocation6], 0
    %10 = vsyncpa [#allocation4], 0
    // Predicated region
    $region2: #{tpu_custom_call.1} parent=1 // pred_check
      _
    $region3: #{tpu_custom_call.1} parent=1 // pred_check_branch
      %12 = sbr.rel (0) target = $region5
    $region4: #{tpu_custom_call.1} parent=1 // pred_region
      %s14 = ssub.s32 256, 256
      %15 = vsyncadd [#allocation3], %s14
      %s17 = sshll.u32 [#allocation2], 4
      %s18 = int_to_ptr.vmem [resolvable:$true] %s17
      %20 = dma.hbm_to_vmem [thread:$0]  %s0, 256, %s18, [#allocation3]
    $region5: #{tpu_custom_call.1} parent=1 // pred_fallthru
      _
    // Predicated region
    $region6: #{tpu_custom_call.1} parent=1 // pred_check
      _
    $region7: #{tpu_custom_call.1} parent=1 // pred_check_branch
      %22 = sbr.rel (0) target = $region9
    $region8: #{tpu_custom_call.1} parent=1 // pred_region
      %s24 = ssub.s32 384, 384
      %25 = vsyncadd [#allocation6], %s24
      %s27 = sshll.u32 [#allocation5], 4
      %s28 = int_to_ptr.vmem [resolvable:$true] %s27
      %30 = dma.hbm_to_vmem [thread:$0]  %s1, 384, %s28, [#allocation6]
    $region9: #{tpu_custom_call.1} parent=1 // pred_fallthru
      _
    // Predicated region
    $region10: #{tpu_custom_call.1} parent=1 // pred_check
      _
    $region11: #{tpu_custom_call.1} parent=1 // pred_check_branch
      %32 = sbr.rel (0) target = $region13
    $region12: #{tpu_custom_call.1} parent=1 // pred_region
      %s34 = ssub.s32 128, 128
      %35 = vsyncadd [#allocation6], %s34
      %s37 = sshll.u32 [#allocation7], 4
      %s38 = int_to_ptr.vmem [resolvable:$true] %s37
      %40 = dma.hbm_to_vmem [thread:$0]  %s2, 128, %s38, [#allocation6]
    $region13: #{tpu_custom_call.1} parent=1 // pred_fallthru
      _
    // Predicated region
    $region14: #{tpu_custom_call.1} parent=1 // pred_check
      _
    $region15: #{tpu_custom_call.1} parent=1 // pred_check_branch
      %42 = sbr.rel (0) target = $region17
    $region16: #{tpu_custom_call.1} parent=1 // pred_region
      %43 = dma.done [#allocation3], 256
    $region17: #{tpu_custom_call.1} parent=1 // pred_fallthru
      _
    // Predicated region
    $region18: #{tpu_custom_call.1} parent=1 // pred_check
      _
    $region19: #{tpu_custom_call.1} parent=1 // pred_check_branch
      %45 = sbr.rel (0) target = $region21
    $region20: #{tpu_custom_call.1} parent=1 // pred_region
      %46 = dma.done [#allocation6], 384
    $region21: #{tpu_custom_call.1} parent=1 // pred_fallthru
      _
    // Predicated region
    $region22: #{tpu_custom_call.1} parent=1 // pred_check
      _
    $region23: #{tpu_custom_call.1} parent=1 // pred_check_branch
      %48 = sbr.rel (0) target = $region25
    $region24: #{tpu_custom_call.1} parent=1 // pred_region
      %49 = dma.done [#allocation6], 128
    $region25: #{tpu_custom_call.1} parent=1 // pred_fallthru
      _
    %v50 = vld [vmem:[#allocation2] sm:$0xff]
    %v51 = vld [vmem:[#allocation2 + $0x8] sm:$0xff]
    %52 = vst [vmem:[#allocation8] sm:$0xff] %v50
    %53 = vst [vmem:[#allocation8 + $0x8] sm:$0xff] %v51
    %v54 = vld [vmem:[#allocation5] sm:$0xff]
    %v55 = vld [vmem:[#allocation5 + $0x8] sm:$0xff]
    %v56 = vld [vmem:[#allocation5 + $0x10] sm:$0xff]
    %57 = vst [vmem:[#allocation8 + $0x10] sm:$0xff] %v54
    %58 = vst [vmem:[#allocation8 + $0x18] sm:$0xff] %v55
    %59 = vst [vmem:[#allocation8 + $0x20] sm:$0xff] %v56
    %v60 = vld [vmem:[#allocation7] sm:$0xff]
    %61 = vst [vmem:[#allocation8 + $0x28] sm:$0xff] %v60
    // Predicated region
    $region26: #{tpu_custom_call.1} parent=1 // pred_check
      _
    $region27: #{tpu_custom_call.1} parent=1 // pred_check_branch
      %63 = sbr.rel (0) target = $region29
    $region28: #{tpu_custom_call.1} parent=1 // pred_region
      %s65 = ssub.s32 768, 768
      %66 = vsyncadd [#allocation4], %s65
      %s68 = sshll.u32 [#allocation8], 4
      %s69 = int_to_ptr.vmem [resolvable:$true] %s68
      %71 = dma.vmem_to_hbm [thread:$0]  %s69, 768, %s3, [#allocation4]
    $region29: #{tpu_custom_call.1} parent=1 // pred_fallthru
      _
    // Predicated region
    $region30: #{tpu_custom_call.1} parent=1 // pred_check
      _
    $region31: #{tpu_custom_call.1} parent=1 // pred_check_branch
      %73 = sbr.rel (0) target = $region33
    $region32: #{tpu_custom_call.1} parent=1 // pred_region
      %74 = dma.done [#allocation4], 768
    $region33: #{tpu_custom_call.1} parent=1 // pred_fallthru
      _
    %75 = vsyncpa [#allocation3], 1
    %76 = vsyncpa [#allocation6], 1
    %77 = vsyncpa [#allocation4], 1

</llo_original>
